<compile_context>
chip_gen: v5e
topology: v5e:2x2
jax: 0.10.0
libtpu: 0.0.40
codegen_flags: <defaults>
</compile_context>

<pallas_src>
import functools

import jax
import jax.numpy as jnp
from jax.experimental import pallas as pl
from jax.experimental.pallas import tpu as pltpu

HIDDEN = 72            # fixed by the module definition
HIDDEN_PAD = 128       # hidden dim padded to one full lane width
LEAKY_SLOPE = 0.01     # torch.nn.LeakyReLU default negative_slope


def _mlp_kernel(x_ref, w1_ref, b1_ref, w2_ref, b2_ref, w3_ref, b3_ref, o_ref):
    # x arrives f32 at native width and is cast to bf16 in-kernel (MXU-native);
    # all dots accumulate in f32, LeakyReLU/bias epilogues run in f32 on the VPU.
    x = x_ref[...].astype(jnp.bfloat16)

    h = jnp.dot(x, w1_ref[...], preferred_element_type=jnp.float32) + b1_ref[...]
    h = jnp.maximum(h, LEAKY_SLOPE * h)                      # LeakyReLU (slope < 1)

    h = jnp.dot(h.astype(jnp.bfloat16), w2_ref[...],
                preferred_element_type=jnp.float32) + b2_ref[...]
    h = jnp.maximum(h, LEAKY_SLOPE * h)

    o_ref[...] = (jnp.dot(h.astype(jnp.bfloat16), w3_ref[...],
                          preferred_element_type=jnp.float32)
                  + b3_ref[...]).astype(o_ref.dtype)


def _round_up(x, m):
    return ((x + m - 1) // m) * m


def prepare_params(params):
    """One-time layout plumbing: pad hidden dims to 128 lanes, cast weights to bf16.

    Call this once per set of weights (outside the per-forward path).
    """
    w1, b1, w2, b2, w3, b3 = (jnp.asarray(a) for a in params)
    d_in = w1.shape[0]
    d_out = w3.shape[1]

    def pad(a, rows, cols):
        return jnp.pad(a, ((0, rows - a.shape[0]), (0, cols - a.shape[1])))

    w1p = pad(w1, d_in, HIDDEN_PAD).astype(jnp.bfloat16)          # (d_in, 128)
    w2p = pad(w2, HIDDEN_PAD, HIDDEN_PAD).astype(jnp.bfloat16)    # (128, 128)
    w3p = pad(w3, HIDDEN_PAD, d_out).astype(jnp.bfloat16)         # (128, d_out)
    b1p = pad(b1.reshape(1, -1), 1, HIDDEN_PAD).astype(jnp.float32)
    b2p = pad(b2.reshape(1, -1), 1, HIDDEN_PAD).astype(jnp.float32)
    b3p = b3.reshape(1, -1).astype(jnp.float32)                   # (1, d_out)
    return (w1p, b1p, w2p, b2p, w3p, b3p)


@functools.partial(jax.jit, static_argnames=("bm",))
def _forward(x, w1p, b1p, w2p, b2p, w3p, b3p, *, bm):
    """x: (n, d_in) f32. Returns logits (n, d_out) f32."""
    n, d_in = x.shape
    d_out = w3p.shape[1]
    grid = (pl.cdiv(n, bm),)   # partial last block: OOB rows masked on the store

    # Weights/biases are small (<50 KiB) and use constant index_maps, so the
    # pipeliner keeps them resident in VMEM across all grid steps.
    full = lambda shape: pl.BlockSpec(shape, lambda i: (0, 0))

    return pl.pallas_call(
        _mlp_kernel,
        out_shape=jax.ShapeDtypeStruct((n, d_out), jnp.float32),
        grid_spec=pl.GridSpec(
            grid=grid,
            in_specs=[
                pl.BlockSpec((bm, d_in), lambda i: (i, 0)),   # x tile (native width)
                full((d_in, HIDDEN_PAD)),                     # W1
                full((1, HIDDEN_PAD)),                        # b1
                full((HIDDEN_PAD, HIDDEN_PAD)),               # W2
                full((1, HIDDEN_PAD)),                        # b2
                full((HIDDEN_PAD, d_out)),                    # W3 (narrow output)
                full((1, d_out)),                             # b3
            ],
            out_specs=pl.BlockSpec((bm, d_out), lambda i: (i, 0)),
        ),
        compiler_params=pltpu.CompilerParams(
            dimension_semantics=("parallel",)),
    )(x, w1p, b1p, w2p, b2p, w3p, b3p)


def _choose_bm(n, block_m):
    """Row-tile size: multiple of 8, capped by batch, >=2 grid steps for big batches."""
    n8 = _round_up(max(n, 1), 8)
    bm = min(_round_up(block_m, 8), n8)
    # v7x has 2 TensorCores; "parallel" only helps with >= 2 grid steps.
    if n8 >= 128 and pl.cdiv(n8, bm) < 2:
        bm = _round_up(pl.cdiv(n8, 2), 8)
    return max(bm, 8)


def policy_forward(x, prepared_params, block_m=1024):
    """Pallas implementation of Policy.forward (logits of the 3-layer MLP)."""
    n = x.shape[0]
    bm = _choose_bm(n, block_m)
    return _forward(x, *prepared_params, bm=bm)


def init_params(key, input_dim, output_dim):
    """Deterministic init mimicking torch.nn.Linear default (uniform +/- 1/sqrt(fan_in))."""
    def linear_init(k, fan_in, fan_out):
        kw, kb = jax.random.split(k)
        bound = 1.0 / jnp.sqrt(fan_in)
        w = jax.random.uniform(kw, (fan_in, fan_out), jnp.float32, -bound, bound)
        b = jax.random.uniform(kb, (1, fan_out), jnp.float32, -bound, bound)
        return w, b

    k1, k2, k3 = jax.random.split(key, 3)
    w1, b1 = linear_init(k1, input_dim, HIDDEN)
    w2, b2 = linear_init(k2, HIDDEN, HIDDEN)
    w3, b3 = linear_init(k3, HIDDEN, output_dim)
    return (w1, b1, w2, b2, w3, b3)


def _reference_bf16(x, params):
    """Pure-JAX reference with the same bf16 rounding of matmul inputs + f32 accum."""
    w1, b1, w2, b2, w3, b3 = params
    f = lambda a: a.astype(jnp.bfloat16).astype(jnp.float32)
    hp = jax.lax.Precision.HIGHEST
    h = jnp.dot(f(x), f(w1), precision=hp) + b1
    h = jnp.where(h > 0, h, LEAKY_SLOPE * h)
    h = jnp.dot(f(h), f(w2), precision=hp) + b2
    h = jnp.where(h > 0, h, LEAKY_SLOPE * h)
    return jnp.dot(f(h), f(w3), precision=hp) + b3


if __name__ == "__main__":
    key = jax.random.PRNGKey(0)
    k_x, k_p, k_x2 = jax.random.split(key, 3)

    input_dim, output_dim = 32, 25
    params = init_params(k_p, input_dim, output_dim)
    prepared = prepare_params(params)   # pad/cast weights once

    # Small batch: single tile (bm clamps to 16), no batch padding needed.
    x_small = jax.random.normal(k_x, (16, input_dim), jnp.float32)
    logits_small = policy_forward(x_small, prepared)
    jax.block_until_ready(logits_small)
    assert logits_small.shape == (16, output_dim)
    ref_small = _reference_bf16(x_small, params)
    assert jnp.allclose(logits_small, ref_small, atol=1e-3, rtol=1e-3), \
        "small-batch mismatch vs reference"

    # Mid-size batch: exercises >=2 grid steps (v7x megacore) and a partial last block.
    x_big = jax.random.normal(k_x2, (200, input_dim), jnp.float32)
    logits_big = policy_forward(x_big, prepared)
    jax.block_until_ready(logits_big)
    assert logits_big.shape == (200, output_dim)
    ref_big = _reference_bf16(x_big, params)
    assert jnp.allclose(logits_big, ref_big, atol=1e-3, rtol=1e-3), \
        "large-batch mismatch vs reference"

    # TODO(synk): fit() (Adam/CrossEntropy training loop) and predict_proba()'s
    # softmax + numpy conversion are host-side utilities outside the forward kernel.
    print("KERNEL_OK")
</pallas_src>

<mosaic_0001>
module attributes {stable_mosaic.version = 11 : i64} {
  func.func @_mlp_kernel(%arg0: i32, %arg1: memref<16x32xf32, #tpu.memory_space<vmem>>, %arg2: memref<32x128xbf16, #tpu.memory_space<vmem>>, %arg3: memref<1x128xf32, #tpu.memory_space<vmem>>, %arg4: memref<128x128xbf16, #tpu.memory_space<vmem>>, %arg5: memref<1x128xf32, #tpu.memory_space<vmem>>, %arg6: memref<128x25xbf16, #tpu.memory_space<vmem>>, %arg7: memref<1x25xf32, #tpu.memory_space<vmem>>, %arg8: memref<16x25xf32, #tpu.memory_space<vmem>>) attributes {dimension_semantics = [#tpu.dimension_semantics<parallel>], iteration_bounds = array<i64: 1>, scalar_prefetch = 0 : i64, scratch_operands = 0 : i64, tpu.core_type = #tpu.core_type<tc>, window_params = [{transform_indices = @transform_0, window_bounds = array<i64: 16, 32>}, {pipeline_mode = #tpu.pipeline_mode<synchronous>, transform_indices = @transform_1, window_bounds = array<i64: 32, 128>}, {pipeline_mode = #tpu.pipeline_mode<synchronous>, transform_indices = @transform_2, window_bounds = array<i64: 1, 128>}, {pipeline_mode = #tpu.pipeline_mode<synchronous>, transform_indices = @transform_3, window_bounds = array<i64: 128, 128>}, {pipeline_mode = #tpu.pipeline_mode<synchronous>, transform_indices = @transform_4, window_bounds = array<i64: 1, 128>}, {pipeline_mode = #tpu.pipeline_mode<synchronous>, transform_indices = @transform_5, window_bounds = array<i64: 128, 25>}, {pipeline_mode = #tpu.pipeline_mode<synchronous>, transform_indices = @transform_6, window_bounds = array<i64: 1, 25>}, {transform_indices = @transform_7, window_bounds = array<i64: 16, 25>}]} {
    %c0 = arith.constant 0 : index
    %c0_0 = arith.constant 0 : index
    %0 = vector.load %arg1[%c0, %c0_0] : memref<16x32xf32, #tpu.memory_space<vmem>>, vector<16x32xf32>
    %1 = arith.truncf %0 : vector<16x32xf32> to vector<16x32xbf16>
    %c0_1 = arith.constant 0 : index
    %c0_2 = arith.constant 0 : index
    %2 = vector.load %arg2[%c0_1, %c0_2] : memref<32x128xbf16, #tpu.memory_space<vmem>>, vector<32x128xbf16>
    %cst = arith.constant dense<0.000000e+00> : vector<16x128xf32>
    %3 = tpu.matmul %1, %2, %cst {dimension_numbers = #tpu.dot_dimension_numbers<[1], [0], [0], [1], [0, 0, 1, 1], [], []>} : vector<16x32xbf16>, vector<32x128xbf16>, vector<16x128xf32> -> vector<16x128xf32>
    %c0_3 = arith.constant 0 : index
    %c0_4 = arith.constant 0 : index
    %4 = vector.load %arg3[%c0_3, %c0_4] : memref<1x128xf32, #tpu.memory_space<vmem>>, vector<1x128xf32>
    %5 = vector.broadcast %4 : vector<1x128xf32> to vector<16x128xf32>
    %6 = arith.addf %3, %5 : vector<16x128xf32>
    %cst_5 = arith.constant 0.00999999977 : f32
    %7 = vector.broadcast %cst_5 : f32 to vector<16x128xf32>
    %8 = arith.mulf %7, %6 : vector<16x128xf32>
    %9 = arith.maximumf %6, %8 : vector<16x128xf32>
    %10 = arith.truncf %9 : vector<16x128xf32> to vector<16x128xbf16>
    %c0_6 = arith.constant 0 : index
    %c0_7 = arith.constant 0 : index
    %11 = vector.load %arg4[%c0_6, %c0_7] : memref<128x128xbf16, #tpu.memory_space<vmem>>, vector<128x128xbf16>
    %cst_8 = arith.constant dense<0.000000e+00> : vector<16x128xf32>
    %12 = tpu.matmul %10, %11, %cst_8 {dimension_numbers = #tpu.dot_dimension_numbers<[1], [0], [0], [1], [0, 0, 1, 1], [], []>} : vector<16x128xbf16>, vector<128x128xbf16>, vector<16x128xf32> -> vector<16x128xf32>
    %c0_9 = arith.constant 0 : index
    %c0_10 = arith.constant 0 : index
    %13 = vector.load %arg5[%c0_9, %c0_10] : memref<1x128xf32, #tpu.memory_space<vmem>>, vector<1x128xf32>
    %14 = vector.broadcast %13 : vector<1x128xf32> to vector<16x128xf32>
    %15 = arith.addf %12, %14 : vector<16x128xf32>
    %cst_11 = arith.constant 0.00999999977 : f32
    %16 = vector.broadcast %cst_11 : f32 to vector<16x128xf32>
    %17 = arith.mulf %16, %15 : vector<16x128xf32>
    %18 = arith.maximumf %15, %17 : vector<16x128xf32>
    %19 = arith.truncf %18 : vector<16x128xf32> to vector<16x128xbf16>
    %c0_12 = arith.constant 0 : index
    %c0_13 = arith.constant 0 : index
    %20 = vector.load %arg6[%c0_12, %c0_13] : memref<128x25xbf16, #tpu.memory_space<vmem>>, vector<128x25xbf16>
    %cst_14 = arith.constant dense<0.000000e+00> : vector<16x25xf32>
    %21 = tpu.matmul %19, %20, %cst_14 {dimension_numbers = #tpu.dot_dimension_numbers<[1], [0], [0], [1], [0, 0, 1, 1], [], []>} : vector<16x128xbf16>, vector<128x25xbf16>, vector<16x25xf32> -> vector<16x25xf32>
    %c0_15 = arith.constant 0 : index
    %c0_16 = arith.constant 0 : index
    %22 = vector.load %arg7[%c0_15, %c0_16] : memref<1x25xf32, #tpu.memory_space<vmem>>, vector<1x25xf32>
    %23 = vector.broadcast %22 : vector<1x25xf32> to vector<16x25xf32>
    %24 = arith.addf %21, %23 : vector<16x25xf32>
    %c0_17 = arith.constant 0 : index
    %c0_18 = arith.constant 0 : index
    %25 = vector.load %arg8[%c0_17, %c0_18] : memref<16x25xf32, #tpu.memory_space<vmem>>, vector<16x25xf32>
    tpu.vector_store %arg8[%c0_17, %c0_18], %24 {strides = array<i32>} : memref<16x25xf32, #tpu.memory_space<vmem>>, vector<16x25xf32>,
    return
  }
  func.func @transform_0(%arg0: i32) -> (i32, i32) {
    %c0_i32 = arith.constant 0 : i32
    %c0_i32_0 = arith.constant 0 : i32
    return %arg0, %c0_i32 : i32, i32
  }
  func.func @transform_1(%arg0: i32) -> (i32, i32) {
    %c0_i32 = arith.constant 0 : i32
    %c0_i32_0 = arith.constant 0 : i32
    %c0_i32_1 = arith.constant 0 : i32
    return %c0_i32, %c0_i32_0 : i32, i32
  }
  func.func @transform_2(%arg0: i32) -> (i32, i32) {
    %c0_i32 = arith.constant 0 : i32
    %c0_i32_0 = arith.constant 0 : i32
    %c0_i32_1 = arith.constant 0 : i32
    return %c0_i32, %c0_i32_0 : i32, i32
  }
  func.func @transform_3(%arg0: i32) -> (i32, i32) {
    %c0_i32 = arith.constant 0 : i32
    %c0_i32_0 = arith.constant 0 : i32
    %c0_i32_1 = arith.constant 0 : i32
    return %c0_i32, %c0_i32_0 : i32, i32
  }
  func.func @transform_4(%arg0: i32) -> (i32, i32) {
    %c0_i32 = arith.constant 0 : i32
    %c0_i32_0 = arith.constant 0 : i32
    %c0_i32_1 = arith.constant 0 : i32
    return %c0_i32, %c0_i32_0 : i32, i32
  }
  func.func @transform_5(%arg0: i32) -> (i32, i32) {
    %c0_i32 = arith.constant 0 : i32
    %c0_i32_0 = arith.constant 0 : i32
    %c0_i32_1 = arith.constant 0 : i32
    return %c0_i32, %c0_i32_0 : i32, i32
  }
  func.func @transform_6(%arg0: i32) -> (i32, i32) {
    %c0_i32 = arith.constant 0 : i32
    %c0_i32_0 = arith.constant 0 : i32
    %c0_i32_1 = arith.constant 0 : i32
    return %c0_i32, %c0_i32_0 : i32, i32
  }
  func.func @transform_7(%arg0: i32) -> (i32, i32) {
    %c0_i32 = arith.constant 0 : i32
    %c0_i32_0 = arith.constant 0 : i32
    return %arg0, %c0_i32 : i32, i32
  }
}

</mosaic_0001>

<llo_original>
// kernel: _forward.1
$region0: #{_forward.1}
  #allocation0 [shape = 'u32[]', space=smem, size = 0x4, offset = 0x4, fixed_abs, tag = 'smem constant byte address 0x4 - core index']
  #allocation1 [shape = 'u32[72,128]{1,0:T(1,128)}', space=vmem, size = 0x9000, scoped, tag = 'internal scratch']
  %s0 = inlined_call_operand.vmem [shape: f32[16,32], index: 0, kind: input, shape index: {}]
  %s1 = inlined_call_operand.hbm [shape: bf16[32,128], index: 1, kind: input, shape index: {}]
  %s2 = inlined_call_operand.vmem [shape: f32[1,128], index: 2, kind: input, shape index: {}]
  %s3 = inlined_call_operand.vmem [shape: bf16[128,128], index: 3, kind: input, shape index: {}]
  %s4 = inlined_call_operand.vmem [shape: f32[1,128], index: 4, kind: input, shape index: {}]
  %s5 = inlined_call_operand.vmem [shape: bf16[128,25], index: 5, kind: input, shape index: {}]
  %s6 = inlined_call_operand.vmem [shape: f32[1,25], index: 6, kind: input, shape index: {}]
  %s7 = inlined_call_operand.hbm [shape: f32[16,25], index: 7, kind: output, shape index: {}]
  %s8 = sld [smem:[#allocation0]]
  $region42: #{_forward.1} parent=0
    _
  %s10 = ssub.s32 1, %s8
  %s11 = scalar_select 0, %s10, %s8
  $region1: #{_forward.1} parent=0
    #allocation2 [shape = 'u8[8192]{0}', space=vmem, size = 0x2000, scoped, tag = 'input window, operand 1, single buffered']
    #allocation3 [shape = 's32[1]{0}', space=sflag, size = 0x4, scoped, tag = 'scoped memory for _forward.1']
    #allocation4 [shape = 's32[1]{0}', space=sflag, size = 0x4, scoped, tag = 'scoped memory for _forward.1']
    #allocation5 [shape = 'u8[8192]{0}', space=vmem, size = 0x2000, scoped, tag = 'output window, operand 0, single buffered']
    %12 = vsyncpa [#allocation3], 0
    %13 = vsyncpa [#allocation4], 0
    // Predicated region
    $region2: #{_forward.1} parent=1 // pred_check
      _
    $region3: #{_forward.1} parent=1 // pred_check_branch
      %15 = sbr.rel (0) target = $region5
    $region4: #{_forward.1} parent=1 // pred_region
      _
    $region5: #{_forward.1} parent=1 // pred_fallthru
      _
    // Predicated region
    $region6: #{_forward.1} parent=1 // pred_check
      _
    $region7: #{_forward.1} parent=1 // pred_check_branch
      %17 = sbr.rel (0) target = $region9
    $region8: #{_forward.1} parent=1 // pred_region
      %19 = vsyncadd [#allocation3], 0
      %s20 = sshll.u32 %s1, 4
      %s21 = int_to_ptr.hbm [resolvable:$true] %s20
      %s22 = sshll.u32 [#allocation2], 4
      %s23 = int_to_ptr.vmem [resolvable:$true] %s22
      %28 = dma.hbm_to_vmem [thread:$0]  %s21, 256, %s23, [#allocation3], 64, 64, 4
    $region9: #{_forward.1} parent=1 // pred_fallthru
      _
    // Predicated region
    $region10: #{_forward.1} parent=1 // pred_check
      _
    $region11: #{_forward.1} parent=1 // pred_check_branch
      %30 = sbr.rel (0) target = $region13
    $region12: #{_forward.1} parent=1 // pred_region
      _
    $region13: #{_forward.1} parent=1 // pred_fallthru
      _
    // Predicated region
    $region14: #{_forward.1} parent=1 // pred_check
      _
    $region15: #{_forward.1} parent=1 // pred_check_branch
      %32 = sbr.rel (0) target = $region17
    $region16: #{_forward.1} parent=1 // pred_region
      _
    $region17: #{_forward.1} parent=1 // pred_fallthru
      _
    // Predicated region
    $region18: #{_forward.1} parent=1 // pred_check
      _
    $region19: #{_forward.1} parent=1 // pred_check_branch
      %34 = sbr.rel (0) target = $region21
    $region20: #{_forward.1} parent=1 // pred_region
      _
    $region21: #{_forward.1} parent=1 // pred_fallthru
      _
    // Predicated region
    $region22: #{_forward.1} parent=1 // pred_check
      _
    $region23: #{_forward.1} parent=1 // pred_check_branch
      %36 = sbr.rel (0) target = $region25
    $region24: #{_forward.1} parent=1 // pred_region
      _
    $region25: #{_forward.1} parent=1 // pred_fallthru
      _
    // Predicated region
    $region26: #{_forward.1} parent=1 // pred_check
      _
    $region27: #{_forward.1} parent=1 // pred_check_branch
      %38 = sbr.rel (0) target = $region29
    $region28: #{_forward.1} parent=1 // pred_region
      _
    $region29: #{_forward.1} parent=1 // pred_fallthru
      _
    // Predicated region
    $region30: #{_forward.1} parent=1 // pred_check
      _
    $region31: #{_forward.1} parent=1 // pred_check_branch
      %40 = sbr.rel (0) target = $region33
    $region32: #{_forward.1} parent=1 // pred_region
      %42 = dma.done [#allocation3], 256
    $region33: #{_forward.1} parent=1 // pred_fallthru
      _
    %v44 = vld [vmem:[%s0] sm:$0xff]
    %v45 = vld [vmem:[%s0 + $0x8] sm:$0xff]
    %v46 = vpack.c.bf16 %v45, %v44
    %v47 = vld [vmem:[#allocation2] sm:$0xf]
    %v48 = vld [vmem:[#allocation2 + $0x4] sm:$0xf]
    %v49 = vld [vmem:[#allocation2 + $0x8] sm:$0xf]
    %v50 = vld [vmem:[#allocation2 + $0xc] sm:$0xf]
    %v51 = vld [vmem:[%s2] sm:$0x1]
    %v53 = vperm.slane %v51, 0
    %v59 = vunpack.c.l.b16 %v47
    %v60 = vunpack.c.l.b16 %v48
    %v61 = vunpack.c.l.b16 %v49
    %v62 = vunpack.c.l.b16 %v50
    %v63 = vpack.c.b16 %v60, %v59
    %v64 = vpack.c.b16 %v62, %v61
    %vm67 = vcmask 261120
    %v69 = vsel %vm67, %v46, 0
    %71 = vmatpush.bf16.msra.mxu0 0
    %72 = vmatpush.bf16.msra.mxu0 0
    %73 = vmatpush.bf16.msra.mxu0 0
    %74 = vmatpush.bf16.msra.mxu0 0
    %75 = vmatpush.bf16.msra.mxu0 0
    %76 = vmatpush.bf16.msra.mxu0 0
    %77 = vmatpush.bf16.msra.mxu0 %v64
    %78 = vmatpush.bf16.msra.mxu0 %v63
    %79 = vmatmul.bf16.gmra.mxu0 %v69
    %v80 = vpop.f32.mrf.mxu0
    %v81 = vadd.f32 %v53, %v80
    %v82 = vpop.f32.mrf.mxu0
    %v83 = vadd.f32 %v53, %v82
    %84 = vdwg.mxu0
    %v85 = vmul.f32 %v81, 0.01
    %v86 = vmul.f32 %v83, 0.01
    %v87 = vmax.f32 %v81, %v85
    %v88 = vmax.f32 %v83, %v86
    %v89 = vpack.c.bf16 %v88, %v87
    %v90 = vld [vmem:[%s3] sm:$0xf]
    %v91 = vld [vmem:[%s3 + $0x4] sm:$0xf]
    %v92 = vld [vmem:[%s3 + $0x8] sm:$0xf]
    %v93 = vld [vmem:[%s3 + $0xc] sm:$0xf]
    %v94 = vld [vmem:[%s3 + $0x10] sm:$0xf]
    %v95 = vld [vmem:[%s3 + $0x14] sm:$0xf]
    %v96 = vld [vmem:[%s3 + $0x18] sm:$0xf]
    %v97 = vld [vmem:[%s3 + $0x1c] sm:$0xf]
    %v98 = vld [vmem:[%s3 + $0x20] sm:$0xf]
    %v99 = vld [vmem:[%s3 + $0x24] sm:$0xf]
    %v100 = vld [vmem:[%s3 + $0x28] sm:$0xf]
    %v101 = vld [vmem:[%s3 + $0x2c] sm:$0xf]
    %v102 = vld [vmem:[%s3 + $0x30] sm:$0xf]
    %v103 = vld [vmem:[%s3 + $0x34] sm:$0xf]
    %v104 = vld [vmem:[%s3 + $0x38] sm:$0xf]
    %v105 = vld [vmem:[%s3 + $0x3c] sm:$0xf]
    %v106 = vld [vmem:[%s4] sm:$0x1]
    %v108 = vperm.slane %v106, 0
    %v126 = vunpack.c.l.b16 %v90
    %v127 = vunpack.c.l.b16 %v91
    %v128 = vunpack.c.l.b16 %v92
    %v129 = vunpack.c.l.b16 %v93
    %v130 = vunpack.c.l.b16 %v94
    %v131 = vunpack.c.l.b16 %v95
    %v132 = vunpack.c.l.b16 %v96
    %v133 = vunpack.c.l.b16 %v97
    %v134 = vunpack.c.l.b16 %v98
    %v135 = vunpack.c.l.b16 %v99
    %v136 = vunpack.c.l.b16 %v100
    %v137 = vunpack.c.l.b16 %v101
    %v138 = vunpack.c.l.b16 %v102
    %v139 = vunpack.c.l.b16 %v103
    %v140 = vunpack.c.l.b16 %v104
    %v141 = vunpack.c.l.b16 %v105
    %v142 = vpack.c.b16 %v127, %v126
    %v143 = vpack.c.b16 %v129, %v128
    %v144 = vpack.c.b16 %v131, %v130
    %v145 = vpack.c.b16 %v133, %v132
    %v146 = vpack.c.b16 %v135, %v134
    %v147 = vpack.c.b16 %v137, %v136
    %v148 = vpack.c.b16 %v139, %v138
    %v149 = vpack.c.b16 %v141, %v140
    %158 = vmatpush.bf16.msra.mxu0 %v149
    %159 = vmatpush.bf16.msra.mxu0 %v148
    %160 = vmatpush.bf16.msra.mxu0 %v147
    %161 = vmatpush.bf16.msra.mxu0 %v146
    %162 = vmatpush.bf16.msra.mxu0 %v145
    %163 = vmatpush.bf16.msra.mxu0 %v144
    %164 = vmatpush.bf16.msra.mxu0 %v143
    %165 = vmatpush.bf16.msra.mxu0 %v142
    %166 = vmatmul.bf16.gmra.mxu0 %v89
    %v167 = vpop.f32.mrf.mxu0
    %v168 = vadd.f32 %v108, %v167
    %v169 = vpop.f32.mrf.mxu0
    %v170 = vadd.f32 %v108, %v169
    %171 = vdwg.mxu0
    %v172 = vmul.f32 %v168, 0.01
    %v173 = vmul.f32 %v170, 0.01
    %v174 = vmax.f32 %v168, %v172
    %v175 = vmax.f32 %v170, %v173
    %v176 = vpack.c.bf16 %v175, %v174
    %v177 = vld [vmem:[%s5] sm:$0xf]
    %v178 = vld [vmem:[%s5 + $0x4] sm:$0xf]
    %v179 = vld [vmem:[%s5 + $0x8] sm:$0xf]
    %v180 = vld [vmem:[%s5 + $0xc] sm:$0xf]
    %v181 = vld [vmem:[%s5 + $0x10] sm:$0xf]
    %v182 = vld [vmem:[%s5 + $0x14] sm:$0xf]
    %v183 = vld [vmem:[%s5 + $0x18] sm:$0xf]
    %v184 = vld [vmem:[%s5 + $0x1c] sm:$0xf]
    %v185 = vld [vmem:[%s5 + $0x20] sm:$0xf]
    %v186 = vld [vmem:[%s5 + $0x24] sm:$0xf]
    %v187 = vld [vmem:[%s5 + $0x28] sm:$0xf]
    %v188 = vld [vmem:[%s5 + $0x2c] sm:$0xf]
    %v189 = vld [vmem:[%s5 + $0x30] sm:$0xf]
    %v190 = vld [vmem:[%s5 + $0x34] sm:$0xf]
    %v191 = vld [vmem:[%s5 + $0x38] sm:$0xf]
    %v192 = vld [vmem:[%s5 + $0x3c] sm:$0xf]
    %v193 = vld [vmem:[%s6] sm:$0x1]
    %v195 = vperm.slane %v193, 0
    %v213 = vunpack.c.l.b16 %v177
    %v214 = vunpack.c.l.b16 %v178
    %v215 = vunpack.c.l.b16 %v179
    %v216 = vunpack.c.l.b16 %v180
    %v217 = vunpack.c.l.b16 %v181
    %v218 = vunpack.c.l.b16 %v182
    %v219 = vunpack.c.l.b16 %v183
    %v220 = vunpack.c.l.b16 %v184
    %v221 = vunpack.c.l.b16 %v185
    %v222 = vunpack.c.l.b16 %v186
    %v223 = vunpack.c.l.b16 %v187
    %v224 = vunpack.c.l.b16 %v188
    %v225 = vunpack.c.l.b16 %v189
    %v226 = vunpack.c.l.b16 %v190
    %v227 = vunpack.c.l.b16 %v191
    %v228 = vunpack.c.l.b16 %v192
    %v229 = vpack.c.b16 %v214, %v213
    %v230 = vpack.c.b16 %v216, %v215
    %v231 = vpack.c.b16 %v218, %v217
    %v232 = vpack.c.b16 %v220, %v219
    %v233 = vpack.c.b16 %v222, %v221
    %v234 = vpack.c.b16 %v224, %v223
    %v235 = vpack.c.b16 %v226, %v225
    %v236 = vpack.c.b16 %v228, %v227
    %245 = vmatpush.bf16.msra.mxu0 %v236
    %246 = vmatpush.bf16.msra.mxu0 %v235
    %247 = vmatpush.bf16.msra.mxu0 %v234
    %248 = vmatpush.bf16.msra.mxu0 %v233
    %249 = vmatpush.bf16.msra.mxu0 %v232
    %250 = vmatpush.bf16.msra.mxu0 %v231
    %251 = vmatpush.bf16.msra.mxu0 %v230
    %252 = vmatpush.bf16.msra.mxu0 %v229
    %253 = vmatmul.bf16.gmra.mxu0 %v176
    %v254 = vpop.f32.mrf.mxu0
    %v255 = vadd.f32 %v195, %v254
    %v256 = vpop.f32.mrf.mxu0
    %v257 = vadd.f32 %v195, %v256
    %258 = vdwg.mxu0
    %vm259 = vcmask 203776
    %260 = vst.msk [vmem:[#allocation5] sm:$0xff] %vm259, %v255
    %261 = vst.msk [vmem:[#allocation5 + $0x8] sm:$0xff] %vm259, %v257
    // Predicated region
    $region34: #{_forward.1} parent=1 // pred_check
      _
    $region35: #{_forward.1} parent=1 // pred_check_branch
      %263 = sbr.rel (0) target = $region37
    $region36: #{_forward.1} parent=1 // pred_region
      %265 = vsyncadd [#allocation4], 0
      %s266 = sshll.u32 [#allocation5], 4
      %s267 = int_to_ptr.vmem [resolvable:$true] %s266
      %s268 = sshll.u32 %s7, 4
      %s269 = int_to_ptr.hbm [resolvable:$true] %s268
      %274 = dma.vmem_to_hbm [thread:$0]  %s267, 256, %s269, [#allocation4], 128, 128, 8
    $region37: #{_forward.1} parent=1 // pred_fallthru
      _
    // Predicated region
    $region38: #{_forward.1} parent=1 // pred_check
      _
    $region39: #{_forward.1} parent=1 // pred_check_branch
      %276 = sbr.rel (0) target = $region41
    $region40: #{_forward.1} parent=1 // pred_region
      %278 = dma.done [#allocation4], 256
    $region41: #{_forward.1} parent=1 // pred_fallthru
      _
    %279 = vsyncpa [#allocation3], 1
    %280 = vsyncpa [#allocation4], 1

</llo_original>
